<compile_context>
chip_gen: v6e
topology: v6e:2x2x1
jax: 0.10.0
libtpu: 0.0.40
codegen_flags: <defaults>
</compile_context>

<pallas_src>
import functools

import jax
import jax.numpy as jnp
from jax.experimental import pallas as pl
from jax.experimental.pallas import tpu as pltpu

_VMEM_LIMIT = 48 * 1024 * 1024   # fits v7x's 64 MiB/TC with headroom; fine on v5e/v6e.


def _pick_tile(n, quantum, cap):
    """Largest multiple of `quantum` dividing `n` that is <= cap, else the whole axis."""
    t = min(cap, n)
    t -= t % quantum
    while t >= quantum:
        if n % t == 0:
            return t
        t -= quantum
    return n


def _int_pow(x, p):
    """x**p for a static positive integer p (stays on the VPU, no exp/log path)."""
    out = x
    for _ in range(p - 1):
        out = out * x
    return out


# --------------------- kernel 1: fused 1x1 qkv projection (MXU) ------------------------

def _qkv_proj_kernel(x_ref, w_ref, q_ref, k_ref, v_ref, *, C, matmul_dtype):
    # x_ref: (1, C, TN) channel-major input (NCHW transpose folded into the contraction);
    # w_ref: (C, 3C) fused weight (already matmul_dtype); outputs: (1, TN, C) each.
    x = x_ref[0].astype(matmul_dtype)
    dn = (((0,), (0,)), ((), ()))            # contract the C axis of both operands
    # TODO(synk): per perf review, confirm via pl.lower_as_mlir that this dim-0
    # contraction does not emit an XLU transpose of the (C, TN) operand at prod shapes.
    out = jax.lax.dot_general(x, w_ref[...], dn, preferred_element_type=jnp.float32)
    q_ref[0] = out[:, 0 * C:1 * C].astype(q_ref.dtype)
    k_ref[0] = out[:, 1 * C:2 * C].astype(k_ref.dtype)
    v_ref[0] = out[:, 2 * C:3 * C].astype(v_ref.dtype)


def qkv_projection(x_bcn, w_qkv, *, compute_dtype, max_tile_n):
    B, C, N = x_bcn.shape
    tn = _pick_tile(N, 128, max_tile_n)      # x's N is the lane dim -> 128-aligned tiles
    kern = functools.partial(_qkv_proj_kernel, C=C, matmul_dtype=compute_dtype)
    out = jax.ShapeDtypeStruct((B, N, C), compute_dtype)
    o_spec = pl.BlockSpec((1, tn, C), lambda b, n: (b, n, 0))
    return pl.pallas_call(
        kern,
        out_shape=(out, out, out),
        grid=(B, N // tn),
        in_specs=[
            pl.BlockSpec((1, C, tn), lambda b, n: (b, 0, n)),
            pl.BlockSpec((C, 3 * C), lambda b, n: (0, 0)),
        ],
        out_specs=(o_spec, o_spec, o_spec),
        compiler_params=pltpu.CompilerParams(
            dimension_semantics=("parallel", "parallel"),
            vmem_limit_bytes=_VMEM_LIMIT),
    )(x_bcn, w_qkv)


# -------------- kernel 2: fused depthwise conv (lepe 3x3 + dwc KxK in one) -------------

def _dw_epi_kernel(x_ref, w_ref, b_ref, o_ref, pad_ref, *, K, H, W):
    # x_ref: (1, H, W, C) v slab; pad_ref: (H+K-1, W+K-1, C) zero-padded VMEM scratch;
    # w_ref: (K*K, C) fused depthwise taps (f32); b_ref: (1, C) fused bias (f32);
    # o_ref: (1, H, W, C) = lepe + feature_map, in compute dtype.
    p = K // 2
    # In-kernel padding: no padded-v HBM round trip.
    pad_ref[...] = jnp.zeros_like(pad_ref)
    pad_ref[p:p + H, p:p + W, :] = x_ref[0]

    w = w_ref[...]
    C = w.shape[-1]
    acc = jnp.zeros((H, W, C), jnp.float32) + b_ref[...]      # init with the bias
    for kw in range(K):
        # One sublane-shifted window load per kw, straight from the ref (no materialized
        # shifted copies of a live value); the kh shift below is a major-dim slice (free).
        xw = pad_ref[:, kw:kw + W, :].astype(jnp.float32)     # (H+K-1, W, C)
        for kh in range(K):
            tap = w[kh * K + kw:kh * K + kw + 1, :]           # (1, C), broadcasts
            acc = acc + xw[kh:kh + H] * tap
    o_ref[0] = acc.astype(o_ref.dtype)


def fused_lepe_fmap_conv(v_hw, w_taps, bias, *, K, compute_dtype):
    B, H, W, C = v_hw.shape
    kern = functools.partial(_dw_epi_kernel, K=K, H=H, W=W)
    return pl.pallas_call(
        kern,
        out_shape=jax.ShapeDtypeStruct((B, H, W, C), compute_dtype),
        grid=(B,),
        in_specs=[
            pl.BlockSpec((1, H, W, C), lambda b: (b, 0, 0, 0)),
            pl.BlockSpec((K * K, C), lambda b: (0, 0)),
            pl.BlockSpec((1, C), lambda b: (0, 0)),
        ],
        out_specs=pl.BlockSpec((1, H, W, C), lambda b: (b, 0, 0, 0)),
        scratch_shapes=[pltpu.VMEM((H + K - 1, W + K - 1, C), compute_dtype)],
        compiler_params=pltpu.CompilerParams(
            dimension_semantics=("parallel",),
            vmem_limit_bytes=_VMEM_LIMIT),
    )(v_hw, w_taps, bias)


# -------------- kernel 3A: N-tiled kv / k-sum accumulation (phase A) -------------------

def _kv_accum_kernel(k_ref, v_ref, pos_ref, inv_scale_ref, kv_ref, ks_ref,
                     *, num_heads, focusing_factor, matmul_dtype):
    n = pl.program_id(1)

    @pl.when(n == 0)
    def _():
        kv_ref[...] = jnp.zeros_like(kv_ref)
        ks_ref[...] = jnp.zeros_like(ks_ref)

    # k transform in f32 (ReLU / scale / focusing); cast to bf16 only for the MXU.
    k = k_ref[0].astype(jnp.float32) + pos_ref[...]
    k = (jnp.maximum(k, 0.0) + 1e-6) * inv_scale_ref[...]
    k_norm = jnp.sqrt(jnp.sum(k * k, axis=-1, keepdims=True))
    kf = _int_pow(k, focusing_factor)
    kf = kf * (k_norm * jax.lax.rsqrt(jnp.sum(kf * kf, axis=-1, keepdims=True)))

    ks_ref[0] += jnp.sum(kf, axis=0, keepdims=True)

    kb = kf.astype(matmul_dtype)
    vb = v_ref[0]                                             # already matmul_dtype
    # kv += k^T v, accumulated in the resident f32 output block.
    # TODO(synk): verify no XLU transpose of the (tile, C) operand is emitted at prod C.
    kv_ref[0] += jax.lax.dot_general(kb, vb, (((0,), (0,)), ((), ())),
                                     preferred_element_type=jnp.float32)

    @pl.when(n == pl.num_programs(1) - 1)
    def _():
        # Block-diagonal head mask, applied once per batch: zero cross-head blocks so
        # phase B can use a single full-width q @ kv matmul for all heads.
        C = kv_ref.shape[-1]
        hd = C // num_heads
        row = jax.lax.broadcasted_iota(jnp.int32, (C, C), 0) // hd
        col = jax.lax.broadcasted_iota(jnp.int32, (C, C), 1) // hd
        kv_ref[0] = kv_ref[0] * (row == col).astype(jnp.float32)


def kv_accumulate(k, v, pos, inv_scale, *, tile_n, num_heads, focusing_factor,
                  compute_dtype):
    B, N, C = k.shape
    kern = functools.partial(_kv_accum_kernel, num_heads=num_heads,
                             focusing_factor=focusing_factor, matmul_dtype=compute_dtype)
    return pl.pallas_call(
        kern,
        out_shape=(jax.ShapeDtypeStruct((B, C, C), jnp.float32),
                   jax.ShapeDtypeStruct((B, 1, C), jnp.float32)),
        grid=(B, N // tile_n),
        in_specs=[
            pl.BlockSpec((1, tile_n, C), lambda b, n: (b, n, 0)),
            pl.BlockSpec((1, tile_n, C), lambda b, n: (b, n, 0)),
            pl.BlockSpec((tile_n, C), lambda b, n: (n, 0)),
            pl.BlockSpec((1, C), lambda b, n: (0, 0)),
        ],
        out_specs=(pl.BlockSpec((1, C, C), lambda b, n: (b, 0, 0)),
                   pl.BlockSpec((1, 1, C), lambda b, n: (b, 0, 0))),
        compiler_params=pltpu.CompilerParams(
            dimension_semantics=("parallel", "arbitrary"),
            vmem_limit_bytes=_VMEM_LIMIT),
    )(k, v, pos, inv_scale)


# -------------- kernel 3B: per-tile q @ kv application (phase B) -----------------------

def _attn_apply_kernel(q_ref, kv_ref, ks_ref, inv_scale_ref, ind_ch_ref, ind_hc_ref,
                       epi_ref, o_ref, *, focusing_factor, matmul_dtype, approx_recip):
    q = q_ref[0].astype(jnp.float32)
    q = (jnp.maximum(q, 0.0) + 1e-6) * inv_scale_ref[...]
    q_norm = jnp.sqrt(jnp.sum(q * q, axis=-1, keepdims=True))
    qf = _int_pow(q, focusing_factor)
    qf = qf * (q_norm * jax.lax.rsqrt(jnp.sum(qf * qf, axis=-1, keepdims=True)))

    # z = 1 / (q . sum_n k) per head: segmented channel sum via a tiny (C, num_heads)
    # indicator matmul, reciprocal (EUP when approx), then expand back to (tile, C).
    ks = ks_ref[0]                                                       # (1, C) f32
    denom = jnp.dot(qf * ks, ind_ch_ref[...],
                    preferred_element_type=jnp.float32)                  # (tile, NH)
    z = pl.reciprocal(denom + 1e-6, approx=approx_recip)
    zc = jnp.dot(z, ind_hc_ref[...], preferred_element_type=jnp.float32)  # (tile, C)

    qb = qf.astype(matmul_dtype)
    kvb = kv_ref[0].astype(matmul_dtype)
    attn = jnp.dot(qb, kvb, preferred_element_type=jnp.float32)          # (tile, C)
    o_ref[0] = attn * zc + epi_ref[0].astype(jnp.float32)


def attn_apply(q, kv, ks, inv_scale, ind_ch, ind_hc, epi, *, tile_n, focusing_factor,
               compute_dtype):
    B, N, C = q.shape
    NH = ind_ch.shape[-1]
    approx = compute_dtype != jnp.float32
    kern = functools.partial(_attn_apply_kernel, focusing_factor=focusing_factor,
                             matmul_dtype=compute_dtype, approx_recip=approx)
    # TODO(synk): at prod shapes, consider pipeline_mode=pl.Buffered(1) for the
    #             constant-index inputs (kv, ks, inv_scale, indicators) to save VMEM.
    return pl.pallas_call(
        kern,
        out_shape=jax.ShapeDtypeStruct((B, N, C), jnp.float32),
        grid=(B, N // tile_n),
        in_specs=[
            pl.BlockSpec((1, tile_n, C), lambda b, n: (b, n, 0)),
            pl.BlockSpec((1, C, C), lambda b, n: (b, 0, 0)),
            pl.BlockSpec((1, 1, C), lambda b, n: (b, 0, 0)),
            pl.BlockSpec((1, C), lambda b, n: (0, 0)),
            pl.BlockSpec((C, NH), lambda b, n: (0, 0)),
            pl.BlockSpec((NH, C), lambda b, n: (0, 0)),
            pl.BlockSpec((1, tile_n, C), lambda b, n: (b, n, 0)),
        ],
        out_specs=pl.BlockSpec((1, tile_n, C), lambda b, n: (b, n, 0)),
        compiler_params=pltpu.CompilerParams(
            dimension_semantics=("parallel", "parallel"),
            vmem_limit_bytes=_VMEM_LIMIT),
    )(q, kv, ks, inv_scale, ind_ch, ind_hc, epi)


# ----------------------------------- JAX glue / wrapper ---------------------------------

def focused_linear_attention_forward(x, params, *, num_heads, resolution,
                                     focusing_factor, kernel_size,
                                     compute_dtype=jnp.bfloat16, max_tile_n=512):
    """x: (B, C, H, W) NCHW, returns (B, C, H, W) f32.  H_sp = H, W_sp = W."""
    B, C, H, W = x.shape
    assert (H, W) == tuple(resolution)
    assert kernel_size % 2 == 1, "fused depthwise conv assumes odd kernel_size"
    assert isinstance(focusing_factor, int) and focusing_factor >= 1
    N = H * W
    hd = C // num_heads

    # --- fused 1x1 qkv projection (NCHW transpose folded into the contraction) ---------
    x_bcn = x.reshape(B, C, N)                                         # free reshape
    w_qkv = jnp.transpose(params["conv_qkv_w"].reshape(3 * C, C)).astype(compute_dtype)
    q, k, v = qkv_projection(x_bcn, w_qkv, compute_dtype=compute_dtype,
                             max_tile_n=max_tile_n)                    # 3 x (B, N, C)

    # --- fuse lepe (get_v 3x3, full C) and feature_map (per-head dwc KxK, weights tiled
    #     across heads) into ONE depthwise KxK conv: embed the 3x3 taps into the filter.
    K = max(3, kernel_size)
    w3 = jnp.transpose(params["get_v_w"][:, 0], (1, 2, 0))             # (3, 3, C)
    w5 = jnp.transpose(jnp.tile(params["dwc_w"][:, 0], (num_heads, 1, 1)),
                       (1, 2, 0))                                      # (ks, ks, C)
    o3 = (K - 3) // 2
    o5 = (K - kernel_size) // 2
    wc = jnp.zeros((K, K, C), jnp.float32)
    wc = wc.at[o3:o3 + 3, o3:o3 + 3, :].add(w3)
    wc = wc.at[o5:o5 + kernel_size, o5:o5 + kernel_size, :].add(w5)
    bc = (params["get_v_b"] + jnp.tile(params["dwc_b"], num_heads)).reshape(1, C)
    epi = fused_lepe_fmap_conv(v.reshape(B, H, W, C), wc.reshape(K * K, C),
                               bc.astype(jnp.float32), K=K,
                               compute_dtype=compute_dtype)            # lepe + fmap

    # --- two-phase focused linear attention --------------------------------------------
    inv_scale = (1.0 / jax.nn.softplus(params["scale"])).reshape(1, C).astype(jnp.float32)
    pos = params["pos_enc"].reshape(N, C).astype(jnp.float32)
    head_of = jnp.arange(C) // hd
    ind_ch = (head_of[:, None] == jnp.arange(num_heads)[None, :]).astype(jnp.float32)
    ind_hc = jnp.transpose(ind_ch)

    tile_n = _pick_tile(N, 8, max_tile_n)
    kv, ksum = kv_accumulate(k, v, pos, inv_scale, tile_n=tile_n, num_heads=num_heads,
                             focusing_factor=focusing_factor, compute_dtype=compute_dtype)
    out_bnc = attn_apply(q, kv, ksum, inv_scale, ind_ch, ind_hc, epi.reshape(B, N, C),
                         tile_n=tile_n, focusing_factor=focusing_factor,
                         compute_dtype=compute_dtype)

    # windows2img is an identity windowing here; permute back to NCHW (one XLA transpose).
    return jnp.transpose(out_bnc, (0, 2, 1)).reshape(B, C, H, W)


# ------------------------------- pure-JAX reference check -------------------------------

def reference_forward(x, params, *, num_heads, resolution, focusing_factor, kernel_size):
    B, C, H, W = x.shape
    N = H * W
    hd = C // num_heads

    w = params["conv_qkv_w"].reshape(3 * C, C)
    qkv = jnp.einsum("oc,bchw->bohw", w, x)
    qkv = jnp.transpose(qkv.reshape(B, 3 * C, N), (0, 2, 1))
    q, k, v = jnp.split(qkv, 3, axis=-1)

    v_nchw = jnp.transpose(v, (0, 2, 1)).reshape(B, C, H, W)
    lepe = jax.lax.conv_general_dilated(
        v_nchw, params["get_v_w"], (1, 1), "SAME",
        feature_group_count=C, dimension_numbers=("NCHW", "OIHW", "NCHW"))
    lepe = lepe + params["get_v_b"][None, :, None, None]
    lepe = jnp.transpose(lepe.reshape(B, C, N), (0, 2, 1))             # (B, N, C)

    scale = jax.nn.softplus(params["scale"])
    k = k + params["pos_enc"]
    q = jax.nn.relu(q) + 1e-6
    k = jax.nn.relu(k) + 1e-6
    q = q / scale
    k = k / scale
    qn = jnp.linalg.norm(q, axis=-1, keepdims=True)
    kn = jnp.linalg.norm(k, axis=-1, keepdims=True)
    q = q ** focusing_factor
    k = k ** focusing_factor
    q = q / jnp.linalg.norm(q, axis=-1, keepdims=True) * qn
    k = k / jnp.linalg.norm(k, axis=-1, keepdims=True) * kn

    def to_heads(t):
        return jnp.transpose(t.reshape(B, N, num_heads, hd), (0, 2, 1, 3)).reshape(
            B * num_heads, N, hd)

    qh, kh, vh = map(to_heads, (q, k, v))
    z = 1.0 / (jnp.einsum("bic,bc->bi", qh, kh.sum(axis=1)) + 1e-6)
    kv = jnp.einsum("bjc,bjd->bcd", kh, vh)
    xh = jnp.einsum("bic,bcd,bi->bid", qh, kv, z)

    fm = jnp.transpose(vh, (0, 2, 1)).reshape(B * num_heads, hd, H, W)
    fm = jax.lax.conv_general_dilated(
        fm, params["dwc_w"], (1, 1), "SAME",
        feature_group_count=hd, dimension_numbers=("NCHW", "OIHW", "NCHW"))
    fm = fm + params["dwc_b"][None, :, None, None]
    fm = jnp.transpose(fm.reshape(B * num_heads, hd, N), (0, 2, 1))

    xh = xh + fm + to_heads(lepe)
    out = jnp.transpose(xh.reshape(B, num_heads, N, hd), (0, 2, 1, 3)).reshape(B, N, C)
    return jnp.transpose(out, (0, 2, 1)).reshape(B, C, H, W)


# ----------------------------------------- main -----------------------------------------

if __name__ == "__main__":
    B, dim, H, W = 2, 32, 8, 8
    num_heads = 4
    focusing_factor = 3
    kernel_size = 5
    resolution = (H, W)
    head_dim = dim // num_heads
    N = H * W

    key = jax.random.PRNGKey(0)
    rk = jax.random.split(key, 8)
    params = {
        "conv_qkv_w": 0.1 * jax.random.normal(rk[0], (3 * dim, dim, 1, 1), jnp.float32),
        "get_v_w":    0.1 * jax.random.normal(rk[1], (dim, 1, 3, 3), jnp.float32),
        "get_v_b":    0.1 * jax.random.normal(rk[2], (dim,), jnp.float32),
        "dwc_w":      0.1 * jax.random.normal(rk[3], (head_dim, 1, kernel_size, kernel_size),
                                              jnp.float32),
        "dwc_b":      0.1 * jax.random.normal(rk[4], (head_dim,), jnp.float32),
        "scale":      0.1 * jax.random.normal(rk[5], (1, 1, dim), jnp.float32),
        "pos_enc":    0.1 * jax.random.normal(rk[6], (1, N, dim), jnp.float32),
    }
    x = jax.random.normal(rk[7], (B, dim, H, W), jnp.float32)

    run = functools.partial(
        focused_linear_attention_forward, x, params, num_heads=num_heads,
        resolution=resolution, focusing_factor=focusing_factor,
        kernel_size=kernel_size, max_tile_n=32)   # 32 -> exercises the 2-tile kv reduction

    # Production path: bf16 inter-kernel tensors + bf16 MXU operands, f32 accumulation.
    out = jax.block_until_ready(run(compute_dtype=jnp.bfloat16))
    # Strict-numerics path: identical kernels with compute_dtype=f32.
    out_f32 = jax.block_until_ready(run(compute_dtype=jnp.float32))

    ref = reference_forward(x, params, num_heads=num_heads, resolution=resolution,
                            focusing_factor=focusing_factor, kernel_size=kernel_size)

    assert out.shape == (B, dim, H, W), out.shape
    err_f32 = float(jnp.max(jnp.abs(out_f32 - ref)))
    err_bf16 = float(jnp.max(jnp.abs(out - ref)))
    assert err_f32 < 2e-3, f"f32 path max abs err {err_f32}"
    assert err_bf16 < 5e-2, f"bf16 path max abs err {err_bf16}"

    print("KERNEL_OK")
</pallas_src>

<mosaic_0001>
module attributes {stable_mosaic.version = 11 : i64} {
  func.func @_qkv_proj_kernel(%arg0: i32, %arg1: i32, %arg2: memref<1x32x64xf32, #tpu.memory_space<vmem>>, %arg3: memref<32x96xbf16, #tpu.memory_space<vmem>>, %arg4: memref<1x64x32xbf16, #tpu.memory_space<vmem>>, %arg5: memref<1x64x32xbf16, #tpu.memory_space<vmem>>, %arg6: memref<1x64x32xbf16, #tpu.memory_space<vmem>>) attributes {dimension_semantics = [#tpu.dimension_semantics<parallel>, #tpu.dimension_semantics<parallel>], iteration_bounds = array<i64: 2, 1>, scalar_prefetch = 0 : i64, scratch_operands = 0 : i64, tpu.core_type = #tpu.core_type<tc>, window_params = [{transform_indices = @transform_0, window_bounds = array<i64: 1, 32, 64>}, {pipeline_mode = #tpu.pipeline_mode<synchronous>, transform_indices = @transform_1, window_bounds = array<i64: 32, 96>}, {transform_indices = @transform_2, window_bounds = array<i64: 1, 64, 32>}, {transform_indices = @transform_3, window_bounds = array<i64: 1, 64, 32>}, {transform_indices = @transform_4, window_bounds = array<i64: 1, 64, 32>}]} {
    %c0 = arith.constant 0 : index
    %c0_0 = arith.constant 0 : index
    %c0_1 = arith.constant 0 : index
    %0 = vector.load %arg2[%c0, %c0_0, %c0_1] : memref<1x32x64xf32, #tpu.memory_space<vmem>>, vector<1x32x64xf32>
    %1 = vector.shape_cast %0 : vector<1x32x64xf32> to vector<32x64xf32>
    %2 = arith.truncf %1 : vector<32x64xf32> to vector<32x64xbf16>
    %c0_2 = arith.constant 0 : index
    %c0_3 = arith.constant 0 : index
    %3 = vector.load %arg3[%c0_2, %c0_3] : memref<32x96xbf16, #tpu.memory_space<vmem>>, vector<32x96xbf16>
    %cst = arith.constant dense<0.000000e+00> : vector<64x96xf32>
    %4 = tpu.matmul %2, %3, %cst {dimension_numbers = #tpu.dot_dimension_numbers<[0], [0], [1], [1], [0, 1, 1, 1], [], []>} : vector<32x64xbf16>, vector<32x96xbf16>, vector<64x96xf32> -> vector<64x96xf32>
    %5 = vector.extract_strided_slice %4 {offsets = [0, 0], sizes = [64, 32], strides = [1, 1]} : vector<64x96xf32> to vector<64x32xf32>
    %6 = arith.truncf %5 : vector<64x32xf32> to vector<64x32xbf16>
    %c0_4 = arith.constant 0 : index
    %c0_5 = arith.constant 0 : index
    %c0_6 = arith.constant 0 : index
    %7 = vector.load %arg4[%c0_4, %c0_5, %c0_6] : memref<1x64x32xbf16, #tpu.memory_space<vmem>>, vector<1x64x32xbf16>
    %8 = vector.shape_cast %7 : vector<1x64x32xbf16> to vector<64x32xbf16>
    %9 = vector.shape_cast %6 : vector<64x32xbf16> to vector<1x64x32xbf16>
    tpu.vector_store %arg4[%c0_4, %c0_5, %c0_6], %9 {strides = array<i32>} : memref<1x64x32xbf16, #tpu.memory_space<vmem>>, vector<1x64x32xbf16>,
    %10 = vector.extract_strided_slice %4 {offsets = [0, 32], sizes = [64, 32], strides = [1, 1]} : vector<64x96xf32> to vector<64x32xf32>
    %11 = arith.truncf %10 : vector<64x32xf32> to vector<64x32xbf16>
    %c0_7 = arith.constant 0 : index
    %c0_8 = arith.constant 0 : index
    %c0_9 = arith.constant 0 : index
    %12 = vector.load %arg5[%c0_7, %c0_8, %c0_9] : memref<1x64x32xbf16, #tpu.memory_space<vmem>>, vector<1x64x32xbf16>
    %13 = vector.shape_cast %12 : vector<1x64x32xbf16> to vector<64x32xbf16>
    %14 = vector.shape_cast %11 : vector<64x32xbf16> to vector<1x64x32xbf16>
    tpu.vector_store %arg5[%c0_7, %c0_8, %c0_9], %14 {strides = array<i32>} : memref<1x64x32xbf16, #tpu.memory_space<vmem>>, vector<1x64x32xbf16>,
    %15 = vector.extract_strided_slice %4 {offsets = [0, 64], sizes = [64, 32], strides = [1, 1]} : vector<64x96xf32> to vector<64x32xf32>
    %16 = arith.truncf %15 : vector<64x32xf32> to vector<64x32xbf16>
    %c0_10 = arith.constant 0 : index
    %c0_11 = arith.constant 0 : index
    %c0_12 = arith.constant 0 : index
    %17 = vector.load %arg6[%c0_10, %c0_11, %c0_12] : memref<1x64x32xbf16, #tpu.memory_space<vmem>>, vector<1x64x32xbf16>
    %18 = vector.shape_cast %17 : vector<1x64x32xbf16> to vector<64x32xbf16>
    %19 = vector.shape_cast %16 : vector<64x32xbf16> to vector<1x64x32xbf16>
    tpu.vector_store %arg6[%c0_10, %c0_11, %c0_12], %19 {strides = array<i32>} : memref<1x64x32xbf16, #tpu.memory_space<vmem>>, vector<1x64x32xbf16>,
    return
  }
  func.func @transform_0(%arg0: i32, %arg1: i32) -> (i32, i32, i32) {
    %c0_i32 = arith.constant 0 : i32
    %c0_i32_0 = arith.constant 0 : i32
    return %arg0, %c0_i32, %arg1 : i32, i32, i32
  }
  func.func @transform_1(%arg0: i32, %arg1: i32) -> (i32, i32) {
    %c0_i32 = arith.constant 0 : i32
    %c0_i32_0 = arith.constant 0 : i32
    %c0_i32_1 = arith.constant 0 : i32
    return %c0_i32, %c0_i32_0 : i32, i32
  }
  func.func @transform_2(%arg0: i32, %arg1: i32) -> (i32, i32, i32) {
    %c0_i32 = arith.constant 0 : i32
    %c0_i32_0 = arith.constant 0 : i32
    return %arg0, %arg1, %c0_i32 : i32, i32, i32
  }
  func.func @transform_3(%arg0: i32, %arg1: i32) -> (i32, i32, i32) {
    %c0_i32 = arith.constant 0 : i32
    %c0_i32_0 = arith.constant 0 : i32
    return %arg0, %arg1, %c0_i32 : i32, i32, i32
  }
  func.func @transform_4(%arg0: i32, %arg1: i32) -> (i32, i32, i32) {
    %c0_i32 = arith.constant 0 : i32
    %c0_i32_0 = arith.constant 0 : i32
    return %arg0, %arg1, %c0_i32 : i32, i32, i32
  }
}

</mosaic_0001>

<llo_original>
// kernel: tpu_custom_call.1
$region0: #{tpu_custom_call.1}
  #allocation0 [shape = 'u32[]', space=smem, size = 0x4, offset = 0x4, fixed_abs, tag = 'smem constant byte address 0x4 - core index']
  #allocation1 [shape = 'u32[144,128]{1,0:T(1,128)}', space=vmem, size = 0x12000, scoped, tag = 'internal scratch']
  %s0 = inlined_call_operand.hbm [shape: f32[2,32,64], index: 0, kind: input, shape index: {}]
  %s1 = inlined_call_operand.hbm [shape: bf16[32,96], index: 1, kind: input, shape index: {}]
  %s2 = inlined_call_operand.vmem [shape: bf16[2,64,32], index: 2, kind: output, shape index: {0}]
  %s3 = inlined_call_operand.vmem [shape: bf16[2,64,32], index: 3, kind: output, shape index: {1}]
  %s4 = inlined_call_operand.vmem [shape: bf16[2,64,32], index: 4, kind: output, shape index: {2}]
  %5 = xla_tuple %s2, %s3, %s4
  %s6 = sld [smem:[#allocation0]]
  $region65: #{tpu_custom_call.1} parent=0
    _
  %s8 = ssub.s32 1, %s6
  %s9 = scalar_select 0, %s8, %s6
  $region1: #{tpu_custom_call.1} parent=0
    #allocation2 [shape = 'u8[32768]{0}', space=vmem, size = 0x8000, scoped, tag = 'input window, operand 0']
    #allocation3 [shape = 's32[2]{0}', space=sflag, size = 0x8, scoped, tag = 'scoped memory for tpu_custom_call.1']
    #allocation4 [shape = 'u8[8192]{0}', space=vmem, size = 0x2000, scoped, tag = 'input window, operand 1, single buffered']
    #allocation5 [shape = 's32[1]{0}', space=sflag, size = 0x4, scoped, tag = 'scoped memory for tpu_custom_call.1']
    %10 = vsyncpa [#allocation3], 0
    %s11 = scalar_lea.sflag [#allocation3], 1
    %12 = vsyncpa %s11, 0
    %13 = vsyncpa [#allocation5], 0
    loop: start=0, step=1, limit=4
    $region2: #{tpu_custom_call.1} parent=1 // loop_pre_header
      _
    $region3: #{tpu_custom_call.1} parent=1 // loop_header
      %s15 = sphi 0, %s19
      %p16 = scmp.ge.s32.totalorder %s15, 4
      %s22 = sphi 0, %s34
      %s23 = sphi 0, %s30
      %s24 = sphi 0, %s22
      %s25 = sphi 0, %s23
      %s26 = sphi 0, %s24
      %s27 = sphi 0, %s25
      %s39 = sphi 0, %s41
      %s42 = sphi 0, %s39
      %s43 = sphi 0, %s42
      %s59 = sphi 0, %s43
      %s63 = sphi 0, %s63
      %s65 = sphi 0, %s63
      %s66 = sphi 0, %s65
      %s80 = sphi 0, %s66
      %s88 = sphi 0, %s90
      %s91 = sphi 0, %s88
      %s92 = sphi 0, %s91
      %s108 = sphi 0, %s92
      %s116 = sphi 0, %s118
      %s119 = sphi 0, %s116
      %s120 = sphi 0, %s119
      %s136 = sphi 0, %s120
      %s144 = sphi 0, %s146
      %s147 = sphi 0, %s144
      %s148 = sphi 0, %s147
      %s164 = sphi 0, %s148
    $region4: #{tpu_custom_call.1} parent=1 // loop_header_branch
      %18 = sbr.rel (%p16) target = $region8
    $region5: #{tpu_custom_call.1} parent=1 // loop_body
      %s20 = ssub.s32 %s15, 1
      %s21 = ssub.s32 %s15, 2
      %s28 = sadd.s32 1, %s23
      %p29 = scmp.ge.s32.totalorder %s28, 1
      %s30 = scalar_select %p29, 0, %s28
      %s31 = sadd.s32 1, %s22
      %s32 = scalar_select %p29, %s31, %s22
      %p33 = scmp.ge.s32.totalorder %s32, 2
      %s34 = scalar_select %p33, 0, %s32
      %s35 = ssub.s32 %s22, %s34
      %s36 = ssub.s32 %s23, %s30
      %s37 = sor.u32 %s35, %s36
      %p38 = scmp.eq.s32.totalorder %s37, 0
      %s40 = sadd.s32 %s39, 1
      %s41 = scalar_select %p38, %s39, %s40
      %p44 = pneg %p38
      %p45 = scmp.eq.s32.totalorder %s15, 1
      %p46 = por %p44, %p45
      %p47 = scmp.ne.s32.totalorder %s39, %s42
      %p48 = scmp.eq.s32.totalorder %s15, 0
      %p49 = por %p47, %p48
      %p50 = scmp.ne.s32.totalorder %s39, %s42
      %p51 = scmp.eq.s32.totalorder %s20, 1
      %p52 = por %p50, %p51
      %p53 = scmp.ne.s32.totalorder %s42, %s43
      %p54 = scmp.eq.s32.totalorder %s20, 0
      %p55 = por %p53, %p54
      %p56 = scmp.ne.s32.totalorder %s42, %s43
      %p57 = scmp.eq.s32.totalorder %s21, 1
      %p58 = por %p56, %p57
      %p60 = scmp.ne.s32.totalorder %s43, %s59
      %p61 = scmp.eq.s32.totalorder %s21, 0
      %p62 = por %p60, %p61
      %s64 = sadd.s32 %s63, 1
      %p67 = scmp.eq.s32.totalorder %s15, 1
      %p68 = scmp.ne.s32.totalorder %s63, %s65
      %p69 = scmp.eq.s32.totalorder %s15, 0
      %p70 = por %p68, %p69
      %p71 = scmp.ne.s32.totalorder %s63, %s65
      %p72 = scmp.eq.s32.totalorder %s20, 1
      %p73 = por %p71, %p72
      %p74 = scmp.ne.s32.totalorder %s65, %s66
      %p75 = scmp.eq.s32.totalorder %s20, 0
      %p76 = por %p74, %p75
      %p77 = scmp.ne.s32.totalorder %s65, %s66
      %p78 = scmp.eq.s32.totalorder %s21, 1
      %p79 = por %p77, %p78
      %p81 = scmp.ne.s32.totalorder %s66, %s80
      %p82 = scmp.eq.s32.totalorder %s21, 0
      %p83 = por %p81, %p82
      %s84 = ssub.s32 %s22, %s34
      %s85 = ssub.s32 %s23, %s30
      %s86 = sor.u32 %s84, %s85
      %p87 = scmp.eq.s32.totalorder %s86, 0
      %s89 = sadd.s32 %s88, 1
      %s90 = scalar_select %p87, %s88, %s89
      %p93 = pneg %p87
      %p94 = scmp.eq.s32.totalorder %s15, 1
      %p95 = por %p93, %p94
      %p96 = scmp.ne.s32.totalorder %s88, %s91
      %p97 = scmp.eq.s32.totalorder %s15, 0
      %p98 = por %p96, %p97
      %p99 = scmp.ne.s32.totalorder %s88, %s91
      %p100 = scmp.eq.s32.totalorder %s20, 1
      %p101 = por %p99, %p100
      %p102 = scmp.ne.s32.totalorder %s91, %s92
      %p103 = scmp.eq.s32.totalorder %s20, 0
      %p104 = por %p102, %p103
      %p105 = scmp.ne.s32.totalorder %s91, %s92
      %p106 = scmp.eq.s32.totalorder %s21, 1
      %p107 = por %p105, %p106
      %p109 = scmp.ne.s32.totalorder %s92, %s108
      %p110 = scmp.eq.s32.totalorder %s21, 0
      %p111 = por %p109, %p110
      %s112 = ssub.s32 %s22, %s34
      %s113 = ssub.s32 %s23, %s30
      %s114 = sor.u32 %s112, %s113
      %p115 = scmp.eq.s32.totalorder %s114, 0
      %s117 = sadd.s32 %s116, 1
      %s118 = scalar_select %p115, %s116, %s117
      %p121 = pneg %p115
      %p122 = scmp.eq.s32.totalorder %s15, 1
      %p123 = por %p121, %p122
      %p124 = scmp.ne.s32.totalorder %s116, %s119
      %p125 = scmp.eq.s32.totalorder %s15, 0
      %p126 = por %p124, %p125
      %p127 = scmp.ne.s32.totalorder %s116, %s119
      %p128 = scmp.eq.s32.totalorder %s20, 1
      %p129 = por %p127, %p128
      %p130 = scmp.ne.s32.totalorder %s119, %s120
      %p131 = scmp.eq.s32.totalorder %s20, 0
      %p132 = por %p130, %p131
      %p133 = scmp.ne.s32.totalorder %s119, %s120
      %p134 = scmp.eq.s32.totalorder %s21, 1
      %p135 = por %p133, %p134
      %p137 = scmp.ne.s32.totalorder %s120, %s136
      %p138 = scmp.eq.s32.totalorder %s21, 0
      %p139 = por %p137, %p138
      %s140 = ssub.s32 %s22, %s34
      %s141 = ssub.s32 %s23, %s30
      %s142 = sor.u32 %s140, %s141
      %p143 = scmp.eq.s32.totalorder %s142, 0
      %s145 = sadd.s32 %s144, 1
      %s146 = scalar_select %p143, %s144, %s145
      %p149 = pneg %p143
      %p150 = scmp.eq.s32.totalorder %s15, 1
      %p151 = por %p149, %p150
      %p152 = scmp.ne.s32.totalorder %s144, %s147
      %p153 = scmp.eq.s32.totalorder %s15, 0
      %p154 = por %p152, %p153
      %p155 = scmp.ne.s32.totalorder %s144, %s147
      %p156 = scmp.eq.s32.totalorder %s20, 1
      %p157 = por %p155, %p156
      %p158 = scmp.ne.s32.totalorder %s147, %s148
      %p159 = scmp.eq.s32.totalorder %s20, 0
      %p160 = por %p158, %p159
      %p161 = scmp.ne.s32.totalorder %s147, %s148
      %p162 = scmp.eq.s32.totalorder %s21, 1
      %p163 = por %p161, %p162
      %p165 = scmp.ne.s32.totalorder %s148, %s164
      %p166 = scmp.eq.s32.totalorder %s21, 0
      %p167 = por %p165, %p166
      %p168 = scmp.le.s32.totalorder 1, %s15
      %p169 = scmp.lt.s32.totalorder %s15, 3
      %p170 = pnand %p168, %p169
      %p171 = pneg %p170
      // Predicated region
      $region9: #{tpu_custom_call.1} parent=5 // pred_check
        _
      $region10: #{tpu_custom_call.1} parent=5 // pred_check_branch
        %173 = sbr.rel (%p170) target = $region12
      $region11: #{tpu_custom_call.1} parent=5 // pred_region
        %s174 = ssub.s32 %s15, 1
        // Predicated region
        $region13: #{tpu_custom_call.1} parent=11 // pred_check
          %p175 = pneg %p76
        $region14: #{tpu_custom_call.1} parent=11 // pred_check_branch
          %177 = sbr.rel (%p175) target = $region16
        $region15: #{tpu_custom_call.1} parent=11 // pred_region
          %s179 = ssub.s32 256, 256
          %180 = vsyncadd [#allocation5], %s179
          %s181 = sshll.u32 [#allocation4], 4
          %s182 = int_to_ptr.vmem [resolvable:$true] %s181
          %187 = dma.hbm_to_vmem [thread:$0]  %s1, 256, %s182, [#allocation5], 64, 64, 4
        $region16: #{tpu_custom_call.1} parent=11 // pred_fallthru
          _
      $region12: #{tpu_custom_call.1} parent=5 // pred_fallthru
        _
      %p188 = scmp.lt.s32.totalorder %s15, 2
      // Predicated region
      $region17: #{tpu_custom_call.1} parent=5 // pred_check
        %p189 = pneg %p188
      $region18: #{tpu_custom_call.1} parent=5 // pred_check_branch
        %191 = sbr.rel (%p189) target = $region20
      $region19: #{tpu_custom_call.1} parent=5 // pred_region
        // Predicated region
        $region21: #{tpu_custom_call.1} parent=19 // pred_check
          %p192 = pneg %p49
        $region22: #{tpu_custom_call.1} parent=19 // pred_check_branch
          %194 = sbr.rel (%p192) target = $region24
        $region23: #{tpu_custom_call.1} parent=19 // pred_region
          %s195 = sand.u32 %s39, 1
          %s196 = scalar_lea.sflag [#allocation3], %s195
          %s197 = sand.u32 %s39, 1
          %s198 = smul.addr %s197, 32
          %s199 = scalar_lea.vmem [#allocation2], %s198
          %s201 = ssub.s32 512, 512
          %202 = vsyncadd %s196, %s201
          %s203 = smul.addr %s22, 4
          %s204 = sadd.s32 %s23, %s203
          %s205 = smul.addr %s204, 128
          %s206 = scalar_lea.hbm %s0, %s205
          %s207 = sshll.u32 %s199, 4
          %s208 = int_to_ptr.vmem [resolvable:$true] %s207
          %213 = dma.hbm_to_vmem [thread:$0]  %s206, 512, %s208, %s196, 128, 128, 8
        $region24: #{tpu_custom_call.1} parent=19 // pred_fallthru
          _
      $region20: #{tpu_custom_call.1} parent=5 // pred_fallthru
        _
      %p214 = scmp.le.s32.totalorder 1, %s15
      %p215 = scmp.lt.s32.totalorder %s15, 3
      %p216 = pnand %p214, %p215
      %p217 = pneg %p216
      // Predicated region
      $region25: #{tpu_custom_call.1} parent=5 // pred_check
        _
      $region26: #{tpu_custom_call.1} parent=5 // pred_check_branch
        %219 = sbr.rel (%p216) target = $region28
      $region27: #{tpu_custom_call.1} parent=5 // pred_region
        %s220 = ssub.s32 %s15, 1
        %s221 = sand.u32 %s42, 1
        %s222 = scalar_lea.sflag [#allocation3], %s221
        %s223 = sand.u32 %s42, 1
        %s224 = smul.addr %s223, 32
        %s225 = scalar_lea.vmem [#allocation2], %s224
        // Predicated region
        $region29: #{tpu_custom_call.1} parent=27 // pred_check
          %p226 = pneg %p55
        $region30: #{tpu_custom_call.1} parent=27 // pred_check_branch
          %228 = sbr.rel (%p226) target = $region32
        $region31: #{tpu_custom_call.1} parent=27 // pred_region
          %229 = dma.done %s222, 512
        $region32: #{tpu_custom_call.1} parent=27 // pred_fallthru
          _
        // Predicated region
        $region33: #{tpu_custom_call.1} parent=27 // pred_check
          %p230 = pneg %p76
        $region34: #{tpu_custom_call.1} parent=27 // pred_check_branch
          %232 = sbr.rel (%p230) target = $region36
        $region35: #{tpu_custom_call.1} parent=27 // pred_region
          %233 = dma.done [#allocation5], 256
        $region36: #{tpu_custom_call.1} parent=27 // pred_fallthru
          _
        %s234 = sand.u32 %s42, 1
        %s235 = scalar_lea.sflag [#allocation3], %s234
        %s236 = sand.u32 %s42, 1
        %s237 = smul.addr %s236, 32
        %s238 = scalar_lea.vmem [#allocation2], %s237
        %p239 = pneg %p55
        %p240 = pneg %p52
        %p241 = pneg %p76
        %p242 = pneg %p73
        %p243 = pneg %p104
        %p244 = pneg %p101
        %s245 = smul.u32 8, %s25
        %p246 = scmp.lt.s32.totalorder %s24, 1
        %s247 = scalar_select %p246, %s24, 1
        %p248 = scmp.lt.s32.totalorder %s245, 7
        %s249 = scalar_select %p248, %s245, 7
        %s250 = smul.addr %s247, 8
        %s251 = sadd.s32 %s249, %s250
        %s252 = smul.addr %s251, 4
        %s253 = scalar_lea.vmem %s2, %s252
        %p254 = pneg %p132
        %p255 = pneg %p129
        %s256 = smul.u32 8, %s25
        %p257 = scmp.lt.s32.totalorder %s24, 1
        %s258 = scalar_select %p257, %s24, 1
        %p259 = scmp.lt.s32.totalorder %s256, 7
        %s260 = scalar_select %p259, %s256, 7
        %s261 = smul.addr %s258, 8
        %s262 = sadd.s32 %s260, %s261
        %s263 = smul.addr %s262, 4
        %s264 = scalar_lea.vmem %s3, %s263
        %p265 = pneg %p160
        %p266 = pneg %p157
        %s267 = smul.u32 8, %s25
        %p268 = scmp.lt.s32.totalorder %s24, 1
        %s269 = scalar_select %p268, %s24, 1
        %p270 = scmp.lt.s32.totalorder %s267, 7
        %s271 = scalar_select %p270, %s267, 7
        %s272 = smul.addr %s269, 8
        %s273 = sadd.s32 %s271, %s272
        %s274 = smul.addr %s273, 4
        %s275 = scalar_lea.vmem %s4, %s274
        %s276 = smul.u32 8, %s25
        %p277 = scmp.lt.s32.totalorder %s24, 1
        %s278 = scalar_select %p277, %s24, 1
        %p279 = scmp.lt.s32.totalorder %s276, 7
        %s280 = scalar_select %p279, %s276, 7
        %s281 = smul.addr %s278, 8
        %s282 = sadd.s32 %s280, %s281
        %s283 = smul.addr %s282, 4
        %s284 = scalar_lea.vmem %s2, %s283
        %s285 = smul.u32 8, %s25
        %s286 = smul.u32 8, %s25
        %p287 = scmp.lt.s32.totalorder %s24, 1
        %s288 = scalar_select %p287, %s24, 1
        %p289 = scmp.lt.s32.totalorder %s286, 7
        %s290 = scalar_select %p289, %s286, 7
        %s291 = smul.addr %s288, 8
        %s292 = sadd.s32 %s290, %s291
        %s293 = smul.addr %s292, 4
        %s294 = scalar_lea.vmem %s3, %s293
        %s295 = smul.u32 8, %s25
        %s296 = smul.u32 8, %s25
        %p297 = scmp.lt.s32.totalorder %s24, 1
        %s298 = scalar_select %p297, %s24, 1
        %p299 = scmp.lt.s32.totalorder %s296, 7
        %s300 = scalar_select %p299, %s296, 7
        %s301 = smul.addr %s298, 8
        %s302 = sadd.s32 %s300, %s301
        %s303 = smul.addr %s302, 4
        %s304 = scalar_lea.vmem %s4, %s303
        %s305 = smul.u32 8, %s25
        %v307 = vld [vmem:[%s225] sm:$0xff]
        %v308 = vld [vmem:[%s225 + $0x8] sm:$0xff]
        %v309 = vld [vmem:[%s225 + $0x10] sm:$0xff]
        %v310 = vld [vmem:[%s225 + $0x18] sm:$0xff]
        %v311 = vpack.c.bf16 %v308, %v307
        %v312 = vpack.c.bf16 %v310, %v309
        %v313 = vld [vmem:[#allocation4] sm:$0xf]
        %v314 = vld [vmem:[#allocation4 + $0x4] sm:$0xf]
        %v315 = vld [vmem:[#allocation4 + $0x8] sm:$0xf]
        %v316 = vld [vmem:[#allocation4 + $0xc] sm:$0xf]
        %317 = vxpose.xlu0.c.b16.start [1/8] %v311, 128
        %318 = vxpose.xlu0.c.b16.cont [2/8] %v312, 128
        %319 = vxpose.xlu0.c.b16.cont [3/8] 0, 128
        %320 = vxpose.xlu0.c.b16.cont [4/8] 0, 128
        %321 = vxpose.xlu0.c.b16.cont [5/8] 0, 128
        %322 = vxpose.xlu0.c.b16.cont [6/8] 0, 128
        %323 = vxpose.xlu0.c.b16.cont [7/8] 0, 128
        %324 = vxpose.xlu0.c.b16.end [8/8] 0, 128
        %v325 = vpop.trf.xlu0
        %v326 = vpop.trf.xlu0
        %v327 = vpop.trf.xlu0
        %v328 = vpop.trf.xlu0
        %v329 = vpop.trf.xlu0
        %v330 = vpop.trf.xlu0
        %v331 = vpop.trf.xlu0
        %v332 = vpop.trf.xlu0
        %v337 = vunpack.c.l.b16 %v313
        %v338 = vunpack.c.l.b16 %v314
        %v339 = vunpack.c.l.b16 %v315
        %v340 = vunpack.c.l.b16 %v316
        %v341 = vpack.c.b16 %v338, %v337
        %v342 = vpack.c.b16 %v340, %v339
        %vm345 = vcmask 261120
        %v347 = vsel %vm345, %v325, 0
        %v350 = vsel %vm345, %v326, 0
        %v353 = vsel %vm345, %v327, 0
        %v356 = vsel %vm345, %v328, 0
        %358 = vmatprep.subr.bf16.mxu0 0
        %359 = vmatpush1.bf16.msra.mxu0 0
        %360 = vmatprep.subr.bf16.mxu0 0
        %361 = vmatpush1.bf16.msra.mxu0 0
        %362 = vmatprep.subr.bf16.mxu0 0
        %363 = vmatpush1.bf16.msra.mxu0 0
        %364 = vmatprep.subr.bf16.mxu0 0
        %365 = vmatpush1.bf16.msra.mxu0 0
        %366 = vmatprep.subr.bf16.mxu0 0
        %367 = vmatpush1.bf16.msra.mxu0 0
        %368 = vmatprep.subr.bf16.mxu0 0
        %369 = vmatpush1.bf16.msra.mxu0 0
        %370 = vmatprep.subr.bf16.mxu0 0
        %371 = vmatpush1.bf16.msra.mxu0 %v342
        %372 = vmatprep.subr.bf16.mxu0 0
        %373 = vmatpush1.bf16.msra.mxu0 %v341
        %374 = vmatprep.subr.bf16.mxu0 0
        %375 = vmatpush2.bf16.msra.mxu0 0
        %376 = vmatprep.subr.bf16.mxu0 0
        %377 = vmatpush2.bf16.msra.mxu0 0
        %378 = vmatprep.subr.bf16.mxu0 0
        %379 = vmatpush2.bf16.msra.mxu0 0
        %380 = vmatprep.subr.bf16.mxu0 0
        %381 = vmatpush2.bf16.msra.mxu0 0
        %382 = vmatprep.subr.bf16.mxu0 0
        %383 = vmatpush2.bf16.msra.mxu0 0
        %384 = vmatprep.subr.bf16.mxu0 0
        %385 = vmatpush2.bf16.msra.mxu0 0
        %386 = vmatprep.subr.bf16.mxu0 0
        %387 = vmatpush2.bf16.msra.mxu0 0
        %388 = vmatprep.subr.bf16.mxu0 0
        %389 = vmatpush2.bf16.msra.mxu0 0
        %390 = vmatprep.mubr.bf16.mxu0 0
        %391 = vmatmul.mubr.bf16.gmra.mxu0 %v347
        %v392 = vpop.f32.mrf.mxu0
        %v393 = vadd.f32 0.0, %v392
        %v394 = vpop.f32.mrf.mxu0
        %v395 = vpop.f32.mrf.mxu0
        %v396 = vadd.f32 0.0, %v395
        %v397 = vpop.f32.mrf.mxu0
        %398 = vmatprep.mubr.bf16.mxu0 0
        %399 = vmatmul.mubr.bf16.gmra.mxu0 %v350
        %v400 = vpop.f32.mrf.mxu0
        %v401 = vadd.f32 0.0, %v400
        %v402 = vpop.f32.mrf.mxu0
        %v403 = vpop.f32.mrf.mxu0
        %v404 = vadd.f32 0.0, %v403
        %v405 = vpop.f32.mrf.mxu0
        %406 = vmatprep.mubr.bf16.mxu0 0
        %407 = vmatmul.mubr.bf16.gmra.mxu0 %v353
        %v408 = vpop.f32.mrf.mxu0
        %v409 = vadd.f32 0.0, %v408
        %v410 = vpop.f32.mrf.mxu0
        %v411 = vpop.f32.mrf.mxu0
        %v412 = vadd.f32 0.0, %v411
        %v413 = vpop.f32.mrf.mxu0
        %414 = vmatprep.mubr.bf16.mxu0 0
        %415 = vmatmul.mubr.bf16.gmra.mxu0 %v356
        %v416 = vpop.f32.mrf.mxu0
        %v417 = vadd.f32 0.0, %v416
        %v418 = vpop.f32.mrf.mxu0
        %v419 = vpop.f32.mrf.mxu0
        %v420 = vadd.f32 0.0, %v419
        %v421 = vpop.f32.mrf.mxu0
        %422 = vdwg.mxu0
        %v423 = vpack.c.bf16 %v396, %v393
        %v424 = vpack.c.bf16 %v404, %v401
        %v425 = vpack.c.bf16 %v412, %v409
        %v426 = vpack.c.bf16 %v420, %v417
        %v431 = vunpack.c.l.b16 %v423
        %v432 = vunpack.c.h.b16 %v423
        %v433 = vunpack.c.l.b16 %v424
        %v434 = vunpack.c.h.b16 %v424
        %v435 = vunpack.c.l.b16 %v425
        %v436 = vunpack.c.h.b16 %v425
        %v437 = vunpack.c.l.b16 %v426
        %v438 = vunpack.c.h.b16 %v426
        %v439 = vpack.c.b16 %v431, %v431
        %v440 = vpack.c.b16 %v432, %v432
        %v441 = vpack.c.b16 %v433, %v433
        %v442 = vpack.c.b16 %v434, %v434
        %v443 = vpack.c.b16 %v435, %v435
        %v444 = vpack.c.b16 %v436, %v436
        %v445 = vpack.c.b16 %v437, %v437
        %v446 = vpack.c.b16 %v438, %v438
        %vm455 = vcmask 257024
        %456 = vst.msk [vmem:[%s284] sm:$0xf] %vm455, %v439
        %457 = vst.msk [vmem:[%s284 + $0x4] sm:$0xf] %vm455, %v440
        %458 = vst.msk [vmem:[%s284 + $0x8] sm:$0xf] %vm455, %v441
        %459 = vst.msk [vmem:[%s284 + $0xc] sm:$0xf] %vm455, %v442
        %460 = vst.msk [vmem:[%s284 + $0x10] sm:$0xf] %vm455, %v443
        %461 = vst.msk [vmem:[%s284 + $0x14] sm:$0xf] %vm455, %v444
        %462 = vst.msk [vmem:[%s284 + $0x18] sm:$0xf] %vm455, %v445
        %463 = vst.msk [vmem:[%s284 + $0x1c] sm:$0xf] %vm455, %v446
        %464 = vrot.lane.b32.xlu0 %v439, 96
        %v465 = vpop.permute.xlu0 %464
        %466 = vrot.lane.b32.xlu0 %v440, 96
        %v467 = vpop.permute.xlu0 %466
        %468 = vrot.lane.b32.xlu0 %v441, 96
        %v469 = vpop.permute.xlu0 %468
        %470 = vrot.lane.b32.xlu0 %v442, 96
        %v471 = vpop.permute.xlu0 %470
        %472 = vrot.lane.b32.xlu0 %v443, 96
        %v473 = vpop.permute.xlu0 %472
        %474 = vrot.lane.b32.xlu0 %v444, 96
        %v475 = vpop.permute.xlu0 %474
        %476 = vrot.lane.b32.xlu0 %v445, 96
        %v477 = vpop.permute.xlu0 %476
        %478 = vrot.lane.b32.xlu0 %v446, 96
        %v479 = vpop.permute.xlu0 %478
        %488 = vst.msk [vmem:[%s294] sm:$0xf] %vm455, %v465
        %489 = vst.msk [vmem:[%s294 + $0x4] sm:$0xf] %vm455, %v467
        %490 = vst.msk [vmem:[%s294 + $0x8] sm:$0xf] %vm455, %v469
        %491 = vst.msk [vmem:[%s294 + $0xc] sm:$0xf] %vm455, %v471
        %492 = vst.msk [vmem:[%s294 + $0x10] sm:$0xf] %vm455, %v473
        %493 = vst.msk [vmem:[%s294 + $0x14] sm:$0xf] %vm455, %v475
        %494 = vst.msk [vmem:[%s294 + $0x18] sm:$0xf] %vm455, %v477
        %495 = vst.msk [vmem:[%s294 + $0x1c] sm:$0xf] %vm455, %v479
        %496 = vrot.lane.b32.xlu0 %v439, 64
        %v497 = vpop.permute.xlu0 %496
        %498 = vrot.lane.b32.xlu0 %v440, 64
        %v499 = vpop.permute.xlu0 %498
        %500 = vrot.lane.b32.xlu0 %v441, 64
        %v501 = vpop.permute.xlu0 %500
        %502 = vrot.lane.b32.xlu0 %v442, 64
        %v503 = vpop.permute.xlu0 %502
        %504 = vrot.lane.b32.xlu0 %v443, 64
        %v505 = vpop.permute.xlu0 %504
        %506 = vrot.lane.b32.xlu0 %v444, 64
        %v507 = vpop.permute.xlu0 %506
        %508 = vrot.lane.b32.xlu0 %v445, 64
        %v509 = vpop.permute.xlu0 %508
        %510 = vrot.lane.b32.xlu0 %v446, 64
        %v511 = vpop.permute.xlu0 %510
        %520 = vst.msk [vmem:[%s304] sm:$0xf] %vm455, %v497
        %521 = vst.msk [vmem:[%s304 + $0x4] sm:$0xf] %vm455, %v499
        %522 = vst.msk [vmem:[%s304 + $0x8] sm:$0xf] %vm455, %v501
        %523 = vst.msk [vmem:[%s304 + $0xc] sm:$0xf] %vm455, %v503
        %524 = vst.msk [vmem:[%s304 + $0x10] sm:$0xf] %vm455, %v505
        %525 = vst.msk [vmem:[%s304 + $0x14] sm:$0xf] %vm455, %v507
        %526 = vst.msk [vmem:[%s304 + $0x18] sm:$0xf] %vm455, %v509
        %527 = vst.msk [vmem:[%s304 + $0x1c] sm:$0xf] %vm455, %v511
        %s528 = smul.u32 8, %s25
        %p529 = scmp.lt.s32.totalorder %s24, 1
        %s530 = scalar_select %p529, %s24, 1
        %p531 = scmp.lt.s32.totalorder %s528, 7
        %s532 = scalar_select %p531, %s528, 7
        %s533 = smul.addr %s530, 8
        %s534 = sadd.s32 %s532, %s533
        %s535 = smul.addr %s534, 4
        %s536 = scalar_lea.vmem %s2, %s535
        %s537 = smul.u32 8, %s25
        %p538 = scmp.lt.s32.totalorder %s24, 1
        %s539 = scalar_select %p538, %s24, 1
        %p540 = scmp.lt.s32.totalorder %s537, 7
        %s541 = scalar_select %p540, %s537, 7
        %s542 = smul.addr %s539, 8
        %s543 = sadd.s32 %s541, %s542
        %s544 = smul.addr %s543, 4
        %s545 = scalar_lea.vmem %s3, %s544
        %s546 = smul.u32 8, %s25
        %p547 = scmp.lt.s32.totalorder %s24, 1
        %s548 = scalar_select %p547, %s24, 1
        %p549 = scmp.lt.s32.totalorder %s546, 7
        %s550 = scalar_select %p549, %s546, 7
        %s551 = smul.addr %s548, 8
        %s552 = sadd.s32 %s550, %s551
        %s553 = smul.addr %s552, 4
        %s554 = scalar_lea.vmem %s4, %s553
        // Predicated region
        $region37: #{tpu_custom_call.1} parent=27 // pred_check
          %p555 = pneg %p101
        $region38: #{tpu_custom_call.1} parent=27 // pred_check_branch
          %557 = sbr.rel (%p555) target = $region40
        $region39: #{tpu_custom_call.1} parent=27 // pred_region
          %s558 = smul.u32 8, %s25
        $region40: #{tpu_custom_call.1} parent=27 // pred_fallthru
          _
        // Predicated region
        $region41: #{tpu_custom_call.1} parent=27 // pred_check
          %p559 = pneg %p129
        $region42: #{tpu_custom_call.1} parent=27 // pred_check_branch
          %561 = sbr.rel (%p559) target = $region44
        $region43: #{tpu_custom_call.1} parent=27 // pred_region
          %s562 = smul.u32 8, %s25
        $region44: #{tpu_custom_call.1} parent=27 // pred_fallthru
          _
        // Predicated region
        $region45: #{tpu_custom_call.1} parent=27 // pred_check
          %p563 = pneg %p157
        $region46: #{tpu_custom_call.1} parent=27 // pred_check_branch
          %565 = sbr.rel (%p563) target = $region48
        $region47: #{tpu_custom_call.1} parent=27 // pred_region
          %s566 = smul.u32 8, %s25
        $region48: #{tpu_custom_call.1} parent=27 // pred_fallthru
          _
      $region28: #{tpu_custom_call.1} parent=5 // pred_fallthru
        _
      %p567 = scmp.le.s32.totalorder 2, %s15
      // Predicated region
      $region49: #{tpu_custom_call.1} parent=5 // pred_check
        %p568 = pneg %p567
      $region50: #{tpu_custom_call.1} parent=5 // pred_check_branch
        %570 = sbr.rel (%p568) target = $region52
      $region51: #{tpu_custom_call.1} parent=5 // pred_region
        %s571 = ssub.s32 %s15, 2
        // Predicated region
        $region53: #{tpu_custom_call.1} parent=51 // pred_check
          %p572 = pneg %p107
        $region54: #{tpu_custom_call.1} parent=51 // pred_check_branch
          %574 = sbr.rel (%p572) target = $region56
        $region55: #{tpu_custom_call.1} parent=51 // pred_region
          %s575 = smul.u32 8, %s27
          %p576 = scmp.lt.s32.totalorder %s26, 1
          %s577 = scalar_select %p576, %s26, 1
          %p578 = scmp.lt.s32.totalorder %s575, 7
          %s579 = scalar_select %p578, %s575, 7
          %s580 = smul.addr %s577, 8
          %s581 = sadd.s32 %s579, %s580
          %s582 = smul.addr %s581, 4
          %s583 = scalar_lea.vmem %s2, %s582
        $region56: #{tpu_custom_call.1} parent=51 // pred_fallthru
          _
        // Predicated region
        $region57: #{tpu_custom_call.1} parent=51 // pred_check
          %p584 = pneg %p135
        $region58: #{tpu_custom_call.1} parent=51 // pred_check_branch
          %586 = sbr.rel (%p584) target = $region60
        $region59: #{tpu_custom_call.1} parent=51 // pred_region
          %s587 = smul.u32 8, %s27
          %p588 = scmp.lt.s32.totalorder %s26, 1
          %s589 = scalar_select %p588, %s26, 1
          %p590 = scmp.lt.s32.totalorder %s587, 7
          %s591 = scalar_select %p590, %s587, 7
          %s592 = smul.addr %s589, 8
          %s593 = sadd.s32 %s591, %s592
          %s594 = smul.addr %s593, 4
          %s595 = scalar_lea.vmem %s3, %s594
        $region60: #{tpu_custom_call.1} parent=51 // pred_fallthru
          _
        // Predicated region
        $region61: #{tpu_custom_call.1} parent=51 // pred_check
          %p596 = pneg %p163
        $region62: #{tpu_custom_call.1} parent=51 // pred_check_branch
          %598 = sbr.rel (%p596) target = $region64
        $region63: #{tpu_custom_call.1} parent=51 // pred_region
          %s599 = smul.u32 8, %s27
          %p600 = scmp.lt.s32.totalorder %s26, 1
          %s601 = scalar_select %p600, %s26, 1
          %p602 = scmp.lt.s32.totalorder %s599, 7
          %s603 = scalar_select %p602, %s599, 7
          %s604 = smul.addr %s601, 8
          %s605 = sadd.s32 %s603, %s604
          %s606 = smul.addr %s605, 4
          %s607 = scalar_lea.vmem %s4, %s606
        $region64: #{tpu_custom_call.1} parent=51 // pred_fallthru
          _
      $region52: #{tpu_custom_call.1} parent=5 // pred_fallthru
        _
    $region6: #{tpu_custom_call.1} parent=1 // loop_footer
      %s19 = sadd.s32 1, %s15
    $region7: #{tpu_custom_call.1} parent=1 // loop_footer_branch
      %14 = sbr.rel target = $region3
    $region8: #{tpu_custom_call.1} parent=1 // loop_exit
      _
    %608 = vsyncpa [#allocation3], 1
    %s609 = scalar_lea.sflag [#allocation3], 1
    %610 = vsyncpa %s609, 1
    %611 = vsyncpa [#allocation5], 1

</llo_original>
